<compile_context>
chip_gen: v5e
topology: v5e:2x2
jax: 0.10.0
libtpu: 0.0.40
codegen_flags: <defaults>
</compile_context>

<pallas_src>
import math

import jax
import jax.numpy as jnp
from jax.experimental import pallas as pl
from jax.experimental.pallas import tpu as pltpu


def _round_up(n, m):
    return ((n + m - 1) // m) * m


def _exp_head_kernel(x_ref, w1_ref, b1_ref, w2_ref, b2_ref, o_ref):
    # x : (bm, D)   w1 : (D, H)   b1 : (1, H)   w2 : (H, O)   b2 : (1, O)
    # o : (bm, O)
    # BN1/BN2 are pre-folded into w1/b1/w2/b2 by the wrapper (eval mode).
    x = x_ref[...].astype(w1_ref.dtype)

    # Linear1 (+folded BN1) on the MXU, f32 accumulation; bias + ReLU on VPU.
    h = jnp.dot(x, w1_ref[...], preferred_element_type=jnp.float32)
    h = jnp.maximum(h + b1_ref[...], 0.0)

    # Linear2 (+folded BN2) on the MXU.
    y = jnp.dot(h.astype(w2_ref.dtype), w2_ref[...],
                preferred_element_type=jnp.float32)
    o_ref[...] = (y + b2_ref[...]).astype(o_ref.dtype)
    # TODO(synk): training-mode BatchNorm (batch statistics) and the
    # forward_inter / inter=True branch are not implemented here.


def exp_head_forward(emb, params, *, block_m=512, eps=1e-5):
    """emb: [..., D].  params: dict with w1 [D,H], b1 [H], w2 [H,O], b2 [O],
    and BN eval stats/affine gamma1/beta1/mean1/var1 [D], gamma2/.../var2 [H]."""
    orig_shape = emb.shape
    D = orig_shape[-1]
    x2d = emb.reshape(-1, D)
    M = x2d.shape[0]

    w1, b1 = params["w1"], params["b1"]
    w2, b2 = params["w2"], params["b2"]
    H = w1.shape[1]
    O = w2.shape[1]
    assert w1.shape[0] == D and w2.shape[0] == H

    f32 = jnp.float32
    # Fold eval-mode BatchNorm into the adjacent Linear (done once, in f32).
    s1 = params["gamma1"].astype(f32) / jnp.sqrt(params["var1"].astype(f32) + eps)
    t1 = params["beta1"].astype(f32) - params["mean1"].astype(f32) * s1
    s2 = params["gamma2"].astype(f32) / jnp.sqrt(params["var2"].astype(f32) + eps)
    t2 = params["beta2"].astype(f32) - params["mean2"].astype(f32) * s2

    w1f = (s1[:, None] * w1.astype(f32)).astype(w1.dtype)           # [D, H]
    b1f = (t1 @ w1.astype(f32) + b1.astype(f32)).reshape(1, H)      # [1, H] f32
    w2f = (s2[:, None] * w2.astype(f32)).astype(w2.dtype)           # [H, O]
    b2f = (t2 @ w2.astype(f32) + b2.astype(f32)).reshape(1, O)      # [1, O] f32

    # Row tile: big enough to amortize per-step overhead; respect the (8,128)
    # block rule on the sublane axis; keep >= 2 tiles when M allows so v7x's
    # two TensorCores both get work on the "parallel" M axis.
    if M % 8 == 0:
        bm = min(block_m, M)
    else:
        bm = min(block_m, _round_up(M, 8))
    if M >= 16 and pl.cdiv(M, bm) < 2:
        bm = _round_up(pl.cdiv(M, 2), 8)
    grid_m = pl.cdiv(M, bm)      # no jnp.pad; edge tile is masked by Pallas

    # VMEM budget for the actual plan (inputs double-buffered by default),
    # with headroom; >= default scoped limit, <= v7x physical (64 MiB).
    param_bytes = (D * H * w1f.dtype.itemsize + H * O * w2f.dtype.itemsize
                   + (H + O) * 4)
    tile_bytes = bm * D * x2d.dtype.itemsize + bm * O * emb.dtype.itemsize
    vmem_est = 2 * tile_bytes + 2 * param_bytes
    vmem_limit = int(min(max(4 * vmem_est, 32 * 1024 * 1024), 64 * 1024 * 1024))

    cost = pl.CostEstimate(
        flops=2 * M * D * H + 2 * M * H * O + 2 * M * H + M * O,
        transcendentals=0,
        bytes_accessed=int(M * D * x2d.dtype.itemsize
                           + M * O * emb.dtype.itemsize + param_bytes),
    )

    out = pl.pallas_call(
        _exp_head_kernel,
        out_shape=jax.ShapeDtypeStruct((M, O), emb.dtype),
        grid_spec=pltpu.PrefetchScalarGridSpec(
            num_scalar_prefetch=0,
            grid=(grid_m,),
            in_specs=[
                pl.BlockSpec((bm, D), lambda i: (i, 0)),   # x rows (pipelined)
                pl.BlockSpec((D, H), lambda i: (0, 0)),    # W1' (grid-invariant)
                pl.BlockSpec((1, H), lambda i: (0, 0)),    # b1'
                pl.BlockSpec((H, O), lambda i: (0, 0)),    # W2' (grid-invariant)
                pl.BlockSpec((1, O), lambda i: (0, 0)),    # b2'
            ],
            out_specs=pl.BlockSpec((bm, O), lambda i: (i, 0)),
        ),
        compiler_params=pltpu.CompilerParams(
            dimension_semantics=("parallel",),
            vmem_limit_bytes=vmem_limit,
        ),
        cost_estimate=cost,
    )(x2d, w1f, b1f, w2f, b2f)

    return out.reshape(orig_shape[:-1] + (O,))


def init_params(key, emb_dim=32, hidden=64, num_classes=7, dtype=jnp.float32):
    """Mimics nn.Linear uniform(-1/sqrt(fan_in), 1/sqrt(fan_in)); BN stats are
    randomized (instead of identity) so the BN path is actually exercised."""
    ks = jax.random.split(key, 12)
    lim1 = 1.0 / math.sqrt(emb_dim)
    lim2 = 1.0 / math.sqrt(hidden)
    return dict(
        # Stored pre-transposed relative to PyTorch: [in, out].
        w1=jax.random.uniform(ks[0], (emb_dim, hidden), dtype, -lim1, lim1),
        b1=jax.random.uniform(ks[1], (hidden,), dtype, -lim1, lim1),
        w2=jax.random.uniform(ks[2], (hidden, num_classes), dtype, -lim2, lim2),
        b2=jax.random.uniform(ks[3], (num_classes,), dtype, -lim2, lim2),
        gamma1=jax.random.uniform(ks[4], (emb_dim,), dtype, 0.8, 1.2),
        beta1=0.1 * jax.random.normal(ks[5], (emb_dim,), dtype),
        mean1=0.2 * jax.random.normal(ks[6], (emb_dim,), dtype),
        var1=jax.random.uniform(ks[7], (emb_dim,), dtype, 0.5, 1.5),
        gamma2=jax.random.uniform(ks[8], (hidden,), dtype, 0.8, 1.2),
        beta2=0.1 * jax.random.normal(ks[9], (hidden,), dtype),
        mean2=0.2 * jax.random.normal(ks[10], (hidden,), dtype),
        var2=jax.random.uniform(ks[11], (hidden,), dtype, 0.5, 1.5),
    )


def exp_head_ref(emb, p, eps=1e-5):
    """Pure-JAX reference mirroring the PyTorch module (eval-mode BN)."""
    x = (emb - p["mean1"]) * (p["gamma1"] / jnp.sqrt(p["var1"] + eps)) + p["beta1"]
    h = jnp.maximum(x @ p["w1"] + p["b1"], 0.0)
    h = (h - p["mean2"]) * (p["gamma2"] / jnp.sqrt(p["var2"] + eps)) + p["beta2"]
    return h @ p["w2"] + p["b2"]


if __name__ == "__main__":
    key = jax.random.PRNGKey(0)
    k_x, k_p = jax.random.split(key)

    batch, emb_dim = 16, 32          # small shapes; module: hidden=64, classes=7
    emb = jax.random.normal(k_x, (batch, emb_dim), dtype=jnp.float32)
    params = init_params(k_p, emb_dim=emb_dim)

    out = exp_head_forward(emb, params)
    out = jax.block_until_ready(out)

    ref = exp_head_ref(emb, params)
    assert out.shape == (batch, 7)
    assert jnp.allclose(out, ref, atol=1e-4, rtol=1e-4), float(
        jnp.max(jnp.abs(out - ref)))

    print("KERNEL_OK")
</pallas_src>

<mosaic_0001>
module attributes {stable_mosaic.version = 11 : i64} {
  func.func @_exp_head_kernel(%arg0: i32, %arg1: memref<8x32xf32, #tpu.memory_space<vmem>>, %arg2: memref<32x64xf32, #tpu.memory_space<vmem>>, %arg3: memref<1x64xf32, #tpu.memory_space<vmem>>, %arg4: memref<64x7xf32, #tpu.memory_space<vmem>>, %arg5: memref<1x7xf32, #tpu.memory_space<vmem>>, %arg6: memref<8x7xf32, #tpu.memory_space<vmem>>) attributes {dimension_semantics = [#tpu.dimension_semantics<parallel>], iteration_bounds = array<i64: 2>, scalar_prefetch = 0 : i64, scratch_operands = 0 : i64, tpu.core_type = #tpu.core_type<tc>, window_params = [{transform_indices = @transform_0, window_bounds = array<i64: 8, 32>}, {pipeline_mode = #tpu.pipeline_mode<synchronous>, transform_indices = @transform_1, window_bounds = array<i64: 32, 64>}, {pipeline_mode = #tpu.pipeline_mode<synchronous>, transform_indices = @transform_2, window_bounds = array<i64: 1, 64>}, {pipeline_mode = #tpu.pipeline_mode<synchronous>, transform_indices = @transform_3, window_bounds = array<i64: 64, 7>}, {pipeline_mode = #tpu.pipeline_mode<synchronous>, transform_indices = @transform_4, window_bounds = array<i64: 1, 7>}, {transform_indices = @transform_5, window_bounds = array<i64: 8, 7>}]} {
    %c0 = arith.constant 0 : index
    %c0_0 = arith.constant 0 : index
    %0 = vector.load %arg1[%c0, %c0_0] : memref<8x32xf32, #tpu.memory_space<vmem>>, vector<8x32xf32>
    %c0_1 = arith.constant 0 : index
    %c0_2 = arith.constant 0 : index
    %1 = vector.load %arg2[%c0_1, %c0_2] : memref<32x64xf32, #tpu.memory_space<vmem>>, vector<32x64xf32>
    %cst = arith.constant dense<0.000000e+00> : vector<8x64xf32>
    %2 = tpu.matmul %0, %1, %cst {dimension_numbers = #tpu.dot_dimension_numbers<[1], [0], [0], [1], [0, 0, 1, 1], [], []>} : vector<8x32xf32>, vector<32x64xf32>, vector<8x64xf32> -> vector<8x64xf32>
    %c0_3 = arith.constant 0 : index
    %c0_4 = arith.constant 0 : index
    %3 = vector.load %arg3[%c0_3, %c0_4] : memref<1x64xf32, #tpu.memory_space<vmem>>, vector<1x64xf32>
    %4 = vector.broadcast %3 : vector<1x64xf32> to vector<8x64xf32>
    %5 = arith.addf %2, %4 : vector<8x64xf32>
    %cst_5 = arith.constant 0.000000e+00 : f32
    %6 = vector.broadcast %cst_5 : f32 to vector<8x64xf32>
    %7 = arith.maximumf %5, %6 : vector<8x64xf32>
    %c0_6 = arith.constant 0 : index
    %c0_7 = arith.constant 0 : index
    %8 = vector.load %arg4[%c0_6, %c0_7] : memref<64x7xf32, #tpu.memory_space<vmem>>, vector<64x7xf32>
    %cst_8 = arith.constant dense<0.000000e+00> : vector<8x7xf32>
    %9 = tpu.matmul %7, %8, %cst_8 {dimension_numbers = #tpu.dot_dimension_numbers<[1], [0], [0], [1], [0, 0, 1, 1], [], []>} : vector<8x64xf32>, vector<64x7xf32>, vector<8x7xf32> -> vector<8x7xf32>
    %c0_9 = arith.constant 0 : index
    %c0_10 = arith.constant 0 : index
    %10 = vector.load %arg5[%c0_9, %c0_10] : memref<1x7xf32, #tpu.memory_space<vmem>>, vector<1x7xf32>
    %11 = vector.broadcast %10 : vector<1x7xf32> to vector<8x7xf32>
    %12 = arith.addf %9, %11 : vector<8x7xf32>
    %c0_11 = arith.constant 0 : index
    %c0_12 = arith.constant 0 : index
    %13 = vector.load %arg6[%c0_11, %c0_12] : memref<8x7xf32, #tpu.memory_space<vmem>>, vector<8x7xf32>
    tpu.vector_store %arg6[%c0_11, %c0_12], %12 {strides = array<i32>} : memref<8x7xf32, #tpu.memory_space<vmem>>, vector<8x7xf32>,
    return
  }
  func.func @transform_0(%arg0: i32) -> (i32, i32) {
    %c0_i32 = arith.constant 0 : i32
    %c0_i32_0 = arith.constant 0 : i32
    return %arg0, %c0_i32 : i32, i32
  }
  func.func @transform_1(%arg0: i32) -> (i32, i32) {
    %c0_i32 = arith.constant 0 : i32
    %c0_i32_0 = arith.constant 0 : i32
    %c0_i32_1 = arith.constant 0 : i32
    return %c0_i32, %c0_i32_0 : i32, i32
  }
  func.func @transform_2(%arg0: i32) -> (i32, i32) {
    %c0_i32 = arith.constant 0 : i32
    %c0_i32_0 = arith.constant 0 : i32
    %c0_i32_1 = arith.constant 0 : i32
    return %c0_i32, %c0_i32_0 : i32, i32
  }
  func.func @transform_3(%arg0: i32) -> (i32, i32) {
    %c0_i32 = arith.constant 0 : i32
    %c0_i32_0 = arith.constant 0 : i32
    %c0_i32_1 = arith.constant 0 : i32
    return %c0_i32, %c0_i32_0 : i32, i32
  }
  func.func @transform_4(%arg0: i32) -> (i32, i32) {
    %c0_i32 = arith.constant 0 : i32
    %c0_i32_0 = arith.constant 0 : i32
    %c0_i32_1 = arith.constant 0 : i32
    return %c0_i32, %c0_i32_0 : i32, i32
  }
  func.func @transform_5(%arg0: i32) -> (i32, i32) {
    %c0_i32 = arith.constant 0 : i32
    %c0_i32_0 = arith.constant 0 : i32
    return %arg0, %c0_i32 : i32, i32
  }
}

</mosaic_0001>

<llo_original>
// kernel: tpu_custom_call.1
$region0: #{tpu_custom_call.1}
  #allocation0 [shape = 'u32[]', space=smem, size = 0x4, offset = 0x4, fixed_abs, tag = 'smem constant byte address 0x4 - core index']
  #allocation1 [shape = 'u32[72,128]{1,0:T(1,128)}', space=vmem, size = 0x9000, scoped, tag = 'internal scratch']
  %s0 = inlined_call_operand.vmem [shape: f32[16,32], index: 0, kind: input, shape index: {}]
  %s1 = inlined_call_operand.vmem [shape: f32[32,64], index: 1, kind: input, shape index: {}]
  %s2 = inlined_call_operand.vmem [shape: f32[1,64], index: 2, kind: input, shape index: {}]
  %s3 = inlined_call_operand.vmem [shape: f32[64,7], index: 3, kind: input, shape index: {}]
  %s4 = inlined_call_operand.vmem [shape: f32[1,7], index: 4, kind: input, shape index: {}]
  %s5 = inlined_call_operand.vmem [shape: f32[16,7], index: 5, kind: output, shape index: {}]
  %s6 = sld [smem:[#allocation0]]
  $region53: #{tpu_custom_call.1} parent=0
    _
  %s8 = ssub.s32 1, %s6
  %s9 = scalar_select 0, %s8, %s6
  loop: start=0, step=1, limit=4
  $region2: #{tpu_custom_call.1} parent=0 // loop_pre_header
    _
  $region3: #{tpu_custom_call.1} parent=0 // loop_header
    %s11 = sphi 0, %s15
    %p12 = scmp.ge.s32.totalorder %s11, 4
    %s21 = sphi 0, %s23
    %s24 = sphi 0, %s21
    %s25 = sphi 0, %s24
    %s41 = sphi 0, %s25
    %s45 = sphi 0, %s45
    %s47 = sphi 0, %s45
    %s48 = sphi 0, %s47
    %s62 = sphi 0, %s48
    %s66 = sphi 0, %s66
    %s68 = sphi 0, %s66
    %s69 = sphi 0, %s68
    %s83 = sphi 0, %s69
    %s87 = sphi 0, %s87
    %s89 = sphi 0, %s87
    %s90 = sphi 0, %s89
    %s104 = sphi 0, %s90
    %s108 = sphi 0, %s108
    %s110 = sphi 0, %s108
    %s111 = sphi 0, %s110
    %s125 = sphi 0, %s111
    %s131 = sphi 0, %s133
    %s134 = sphi 0, %s131
    %s135 = sphi 0, %s134
    %s151 = sphi 0, %s135
  $region4: #{tpu_custom_call.1} parent=0 // loop_header_branch
    %14 = sbr.rel (%p12) target = $region8
  $region5: #{tpu_custom_call.1} parent=0 // loop_body
    %s16 = ssub.s32 %s11, 1
    %s17 = ssub.s32 %s11, 2
    %s18 = sadd.s32 %s11, 1
    %s19 = ssub.s32 %s11, %s18
    %p20 = scmp.eq.s32.totalorder %s19, 0
    %s22 = sadd.s32 %s21, 1
    %s23 = scalar_select %p20, %s21, %s22
    %p26 = pneg %p20
    %p27 = scmp.eq.s32.totalorder %s11, 1
    %p28 = por %p26, %p27
    %p29 = scmp.ne.s32.totalorder %s21, %s24
    %p30 = scmp.eq.s32.totalorder %s11, 0
    %p31 = por %p29, %p30
    %p32 = scmp.ne.s32.totalorder %s21, %s24
    %p33 = scmp.eq.s32.totalorder %s16, 1
    %p34 = por %p32, %p33
    %p35 = scmp.ne.s32.totalorder %s24, %s25
    %p36 = scmp.eq.s32.totalorder %s16, 0
    %p37 = por %p35, %p36
    %p38 = scmp.ne.s32.totalorder %s24, %s25
    %p39 = scmp.eq.s32.totalorder %s17, 1
    %p40 = por %p38, %p39
    %p42 = scmp.ne.s32.totalorder %s25, %s41
    %p43 = scmp.eq.s32.totalorder %s17, 0
    %p44 = por %p42, %p43
    %s46 = sadd.s32 %s45, 1
    %p49 = scmp.eq.s32.totalorder %s11, 1
    %p50 = scmp.ne.s32.totalorder %s45, %s47
    %p51 = scmp.eq.s32.totalorder %s11, 0
    %p52 = por %p50, %p51
    %p53 = scmp.ne.s32.totalorder %s45, %s47
    %p54 = scmp.eq.s32.totalorder %s16, 1
    %p55 = por %p53, %p54
    %p56 = scmp.ne.s32.totalorder %s47, %s48
    %p57 = scmp.eq.s32.totalorder %s16, 0
    %p58 = por %p56, %p57
    %p59 = scmp.ne.s32.totalorder %s47, %s48
    %p60 = scmp.eq.s32.totalorder %s17, 1
    %p61 = por %p59, %p60
    %p63 = scmp.ne.s32.totalorder %s48, %s62
    %p64 = scmp.eq.s32.totalorder %s17, 0
    %p65 = por %p63, %p64
    %s67 = sadd.s32 %s66, 1
    %p70 = scmp.eq.s32.totalorder %s11, 1
    %p71 = scmp.ne.s32.totalorder %s66, %s68
    %p72 = scmp.eq.s32.totalorder %s11, 0
    %p73 = por %p71, %p72
    %p74 = scmp.ne.s32.totalorder %s66, %s68
    %p75 = scmp.eq.s32.totalorder %s16, 1
    %p76 = por %p74, %p75
    %p77 = scmp.ne.s32.totalorder %s68, %s69
    %p78 = scmp.eq.s32.totalorder %s16, 0
    %p79 = por %p77, %p78
    %p80 = scmp.ne.s32.totalorder %s68, %s69
    %p81 = scmp.eq.s32.totalorder %s17, 1
    %p82 = por %p80, %p81
    %p84 = scmp.ne.s32.totalorder %s69, %s83
    %p85 = scmp.eq.s32.totalorder %s17, 0
    %p86 = por %p84, %p85
    %s88 = sadd.s32 %s87, 1
    %p91 = scmp.eq.s32.totalorder %s11, 1
    %p92 = scmp.ne.s32.totalorder %s87, %s89
    %p93 = scmp.eq.s32.totalorder %s11, 0
    %p94 = por %p92, %p93
    %p95 = scmp.ne.s32.totalorder %s87, %s89
    %p96 = scmp.eq.s32.totalorder %s16, 1
    %p97 = por %p95, %p96
    %p98 = scmp.ne.s32.totalorder %s89, %s90
    %p99 = scmp.eq.s32.totalorder %s16, 0
    %p100 = por %p98, %p99
    %p101 = scmp.ne.s32.totalorder %s89, %s90
    %p102 = scmp.eq.s32.totalorder %s17, 1
    %p103 = por %p101, %p102
    %p105 = scmp.ne.s32.totalorder %s90, %s104
    %p106 = scmp.eq.s32.totalorder %s17, 0
    %p107 = por %p105, %p106
    %s109 = sadd.s32 %s108, 1
    %p112 = scmp.eq.s32.totalorder %s11, 1
    %p113 = scmp.ne.s32.totalorder %s108, %s110
    %p114 = scmp.eq.s32.totalorder %s11, 0
    %p115 = por %p113, %p114
    %p116 = scmp.ne.s32.totalorder %s108, %s110
    %p117 = scmp.eq.s32.totalorder %s16, 1
    %p118 = por %p116, %p117
    %p119 = scmp.ne.s32.totalorder %s110, %s111
    %p120 = scmp.eq.s32.totalorder %s16, 0
    %p121 = por %p119, %p120
    %p122 = scmp.ne.s32.totalorder %s110, %s111
    %p123 = scmp.eq.s32.totalorder %s17, 1
    %p124 = por %p122, %p123
    %p126 = scmp.ne.s32.totalorder %s111, %s125
    %p127 = scmp.eq.s32.totalorder %s17, 0
    %p128 = por %p126, %p127
    %s129 = ssub.s32 %s11, %s18
    %p130 = scmp.eq.s32.totalorder %s129, 0
    %s132 = sadd.s32 %s131, 1
    %s133 = scalar_select %p130, %s131, %s132
    %p136 = pneg %p130
    %p137 = scmp.eq.s32.totalorder %s11, 1
    %p138 = por %p136, %p137
    %p139 = scmp.ne.s32.totalorder %s131, %s134
    %p140 = scmp.eq.s32.totalorder %s11, 0
    %p141 = por %p139, %p140
    %p142 = scmp.ne.s32.totalorder %s131, %s134
    %p143 = scmp.eq.s32.totalorder %s16, 1
    %p144 = por %p142, %p143
    %p145 = scmp.ne.s32.totalorder %s134, %s135
    %p146 = scmp.eq.s32.totalorder %s16, 0
    %p147 = por %p145, %p146
    %p148 = scmp.ne.s32.totalorder %s134, %s135
    %p149 = scmp.eq.s32.totalorder %s17, 1
    %p150 = por %p148, %p149
    %p152 = scmp.ne.s32.totalorder %s135, %s151
    %p153 = scmp.eq.s32.totalorder %s17, 0
    %p154 = por %p152, %p153
    %p155 = scmp.le.s32.totalorder 1, %s11
    %p156 = scmp.lt.s32.totalorder %s11, 3
    %p157 = pnand %p155, %p156
    %p158 = pneg %p157
    // Predicated region
    $region9: #{tpu_custom_call.1} parent=5 // pred_check
      _
    $region10: #{tpu_custom_call.1} parent=5 // pred_check_branch
      %160 = sbr.rel (%p157) target = $region12
    $region11: #{tpu_custom_call.1} parent=5 // pred_region
      %s161 = ssub.s32 %s11, 1
      // Predicated region
      $region13: #{tpu_custom_call.1} parent=11 // pred_check
        %p162 = pneg %p58
      $region14: #{tpu_custom_call.1} parent=11 // pred_check_branch
        %164 = sbr.rel (%p162) target = $region16
      $region15: #{tpu_custom_call.1} parent=11 // pred_region
        _
      $region16: #{tpu_custom_call.1} parent=11 // pred_fallthru
        _
      // Predicated region
      $region17: #{tpu_custom_call.1} parent=11 // pred_check
        %p165 = pneg %p79
      $region18: #{tpu_custom_call.1} parent=11 // pred_check_branch
        %167 = sbr.rel (%p165) target = $region20
      $region19: #{tpu_custom_call.1} parent=11 // pred_region
        _
      $region20: #{tpu_custom_call.1} parent=11 // pred_fallthru
        _
      // Predicated region
      $region21: #{tpu_custom_call.1} parent=11 // pred_check
        %p168 = pneg %p100
      $region22: #{tpu_custom_call.1} parent=11 // pred_check_branch
        %170 = sbr.rel (%p168) target = $region24
      $region23: #{tpu_custom_call.1} parent=11 // pred_region
        _
      $region24: #{tpu_custom_call.1} parent=11 // pred_fallthru
        _
      // Predicated region
      $region25: #{tpu_custom_call.1} parent=11 // pred_check
        %p171 = pneg %p121
      $region26: #{tpu_custom_call.1} parent=11 // pred_check_branch
        %173 = sbr.rel (%p171) target = $region28
      $region27: #{tpu_custom_call.1} parent=11 // pred_region
        _
      $region28: #{tpu_custom_call.1} parent=11 // pred_fallthru
        _
    $region12: #{tpu_custom_call.1} parent=5 // pred_fallthru
      _
    %p174 = scmp.lt.s32.totalorder %s11, 2
    // Predicated region
    $region29: #{tpu_custom_call.1} parent=5 // pred_check
      %p175 = pneg %p174
    $region30: #{tpu_custom_call.1} parent=5 // pred_check_branch
      %177 = sbr.rel (%p175) target = $region32
    $region31: #{tpu_custom_call.1} parent=5 // pred_region
      // Predicated region
      $region33: #{tpu_custom_call.1} parent=31 // pred_check
        %p178 = pneg %p31
      $region34: #{tpu_custom_call.1} parent=31 // pred_check_branch
        %180 = sbr.rel (%p178) target = $region36
      $region35: #{tpu_custom_call.1} parent=31 // pred_region
        %p181 = scmp.lt.s32.totalorder %s11, 1
        %s182 = scalar_select %p181, %s11, 1
        %s183 = smul.addr %s182, 8
        %s184 = scalar_lea.vmem %s0, %s183
      $region36: #{tpu_custom_call.1} parent=31 // pred_fallthru
        _
    $region32: #{tpu_custom_call.1} parent=5 // pred_fallthru
      _
    %p185 = scmp.le.s32.totalorder 1, %s11
    %p186 = scmp.lt.s32.totalorder %s11, 3
    %p187 = pnand %p185, %p186
    %p188 = pneg %p187
    // Predicated region
    $region37: #{tpu_custom_call.1} parent=5 // pred_check
      _
    $region38: #{tpu_custom_call.1} parent=5 // pred_check_branch
      %190 = sbr.rel (%p187) target = $region40
    $region39: #{tpu_custom_call.1} parent=5 // pred_region
      %s191 = ssub.s32 %s11, 1
      %p192 = scmp.lt.s32.totalorder %s16, 1
      %s193 = scalar_select %p192, %s16, 1
      %s194 = smul.addr %s193, 8
      %s195 = scalar_lea.vmem %s0, %s194
      %p196 = pneg %p37
      %p197 = pneg %p34
      %p198 = pneg %p58
      %p199 = pneg %p55
      %p200 = pneg %p79
      %p201 = pneg %p76
      %p202 = pneg %p100
      %p203 = pneg %p97
      %p204 = pneg %p121
      %p205 = pneg %p118
      %p206 = pneg %p147
      %p207 = pneg %p144
      %p208 = scmp.lt.s32.totalorder %s16, 1
      %s209 = scalar_select %p208, %s16, 1
      %s210 = smul.addr %s209, 8
      %s211 = scalar_lea.vmem %s5, %s210
      %p212 = scmp.lt.s32.totalorder %s16, 1
      %s213 = scalar_select %p212, %s16, 1
      %s214 = smul.addr %s213, 8
      %s215 = scalar_lea.vmem %s0, %s214
      %p216 = scmp.lt.s32.totalorder %s16, 1
      %s217 = scalar_select %p216, %s16, 1
      %s218 = smul.addr %s217, 8
      %s219 = scalar_lea.vmem %s5, %s218
      %v220 = vld [vmem:[%s215] sm:$0xff]
      %v221 = vld [vmem:[%s1] sm:$0xff]
      %v222 = vld [vmem:[%s1 + $0x8] sm:$0xff]
      %v223 = vld [vmem:[%s1 + $0x10] sm:$0xff]
      %v224 = vld [vmem:[%s1 + $0x18] sm:$0xff]
      %v225 = vld [vmem:[%s2] sm:$0x1]
      %v227 = vperm.slane %v225, 0
      %vm229 = vcmask 261120
      %v231 = vsel %vm229, %v220, 0
      %233 = vmatpush.msra.mxu0 0.0
      %234 = vmatpush.msra.mxu0 0.0
      %235 = vmatpush.msra.mxu0 0.0
      %236 = vmatpush.msra.mxu0 0.0
      %237 = vmatpush.msra.mxu0 0.0
      %238 = vmatpush.msra.mxu0 0.0
      %239 = vmatpush.msra.mxu0 0.0
      %240 = vmatpush.msra.mxu0 0.0
      %241 = vmatpush.msra.mxu0 0.0
      %242 = vmatpush.msra.mxu0 0.0
      %243 = vmatpush.msra.mxu0 0.0
      %244 = vmatpush.msra.mxu0 0.0
      %245 = vmatpush.msra.mxu0 %v224
      %246 = vmatpush.msra.mxu0 %v223
      %247 = vmatpush.msra.mxu0 %v222
      %248 = vmatpush.msra.mxu0 %v221
      %249 = vmatmul.f32.gmra.mxu0 %v231
      %v250 = vpop.f32.mrf.mxu0
      %v251 = vadd.f32 %v227, %v250
      %252 = vdwg.mxu0
      %v253 = vmax.f32 %v251, 0.0
      %v254 = vld [vmem:[%s3] sm:$0xff]
      %v255 = vld [vmem:[%s3 + $0x8] sm:$0xff]
      %v256 = vld [vmem:[%s3 + $0x10] sm:$0xff]
      %v257 = vld [vmem:[%s3 + $0x18] sm:$0xff]
      %v258 = vld [vmem:[%s3 + $0x20] sm:$0xff]
      %v259 = vld [vmem:[%s3 + $0x28] sm:$0xff]
      %v260 = vld [vmem:[%s3 + $0x30] sm:$0xff]
      %v261 = vld [vmem:[%s3 + $0x38] sm:$0xff]
      %v262 = vld [vmem:[%s4] sm:$0x1]
      %v264 = vperm.slane %v262, 0
      %vm266 = vcmask 523264
      %v268 = vsel %vm266, %v253, 0
      %270 = vmatpush.msra.mxu0 0.0
      %271 = vmatpush.msra.mxu0 0.0
      %272 = vmatpush.msra.mxu0 0.0
      %273 = vmatpush.msra.mxu0 0.0
      %274 = vmatpush.msra.mxu0 0.0
      %275 = vmatpush.msra.mxu0 0.0
      %276 = vmatpush.msra.mxu0 0.0
      %277 = vmatpush.msra.mxu0 0.0
      %278 = vmatpush.msra.mxu0 %v261
      %279 = vmatpush.msra.mxu0 %v260
      %280 = vmatpush.msra.mxu0 %v259
      %281 = vmatpush.msra.mxu0 %v258
      %282 = vmatpush.msra.mxu0 %v257
      %283 = vmatpush.msra.mxu0 %v256
      %284 = vmatpush.msra.mxu0 %v255
      %285 = vmatpush.msra.mxu0 %v254
      %286 = vmatmul.f32.gmra.mxu0 %v268
      %v287 = vpop.f32.mrf.mxu0
      %v288 = vadd.f32 %v264, %v287
      %289 = vdwg.mxu0
      %vm290 = vcmask 56320
      %291 = vst.msk [vmem:[%s219] sm:$0xff] %vm290, %v288
      %p292 = scmp.lt.s32.totalorder %s16, 1
      %s293 = scalar_select %p292, %s16, 1
      %s294 = smul.addr %s293, 8
      %s295 = scalar_lea.vmem %s5, %s294
      // Predicated region
      $region41: #{tpu_custom_call.1} parent=39 // pred_check
        %p296 = pneg %p144
      $region42: #{tpu_custom_call.1} parent=39 // pred_check_branch
        %298 = sbr.rel (%p296) target = $region44
      $region43: #{tpu_custom_call.1} parent=39 // pred_region
        _
      $region44: #{tpu_custom_call.1} parent=39 // pred_fallthru
        _
    $region40: #{tpu_custom_call.1} parent=5 // pred_fallthru
      _
    %p299 = scmp.le.s32.totalorder 2, %s11
    // Predicated region
    $region45: #{tpu_custom_call.1} parent=5 // pred_check
      %p300 = pneg %p299
    $region46: #{tpu_custom_call.1} parent=5 // pred_check_branch
      %302 = sbr.rel (%p300) target = $region48
    $region47: #{tpu_custom_call.1} parent=5 // pred_region
      %s303 = ssub.s32 %s11, 2
      // Predicated region
      $region49: #{tpu_custom_call.1} parent=47 // pred_check
        %p304 = pneg %p150
      $region50: #{tpu_custom_call.1} parent=47 // pred_check_branch
        %306 = sbr.rel (%p304) target = $region52
      $region51: #{tpu_custom_call.1} parent=47 // pred_region
        %p307 = scmp.lt.s32.totalorder %s17, 1
        %s308 = scalar_select %p307, %s17, 1
        %s309 = smul.addr %s308, 8
        %s310 = scalar_lea.vmem %s5, %s309
      $region52: #{tpu_custom_call.1} parent=47 // pred_fallthru
        _
    $region48: #{tpu_custom_call.1} parent=5 // pred_fallthru
      _
  $region6: #{tpu_custom_call.1} parent=0 // loop_footer
    %s15 = sadd.s32 1, %s11
  $region7: #{tpu_custom_call.1} parent=0 // loop_footer_branch
    %10 = sbr.rel target = $region3
  $region8: #{tpu_custom_call.1} parent=0 // loop_exit
    _

</llo_original>
